<compile_context>
chip_gen: v7x
topology: tpu7x:2x2x1
jax: 0.10.0
libtpu: 0.0.40
codegen_flags: <defaults>
</compile_context>

<pallas_src>
import functools

import jax
import jax.numpy as jnp
from jax import lax
from jax.experimental import pallas as pl
from jax.experimental.pallas import tpu as pltpu


_SELU_ALPHA = 1.6732632423543772848170429916717
_SELU_SCALE = 1.0507009873554804934193349852946


def _selu(v):
    # scale * (max(0, x) + min(0, alpha*(exp(x)-1))); clamp exp arg for safety.
    return _SELU_SCALE * jnp.where(
        v > 0.0, v, _SELU_ALPHA * (jnp.exp(jnp.minimum(v, 0.0)) - 1.0))


def _round_up(n, m):
    return ((n + m - 1) // m) * m


def _round8(n):
    return _round_up(n, 8)


# ----------------------------- Pallas kernel --------------------------------
def _classes_head_kernel(x_ref, p_ref, o_ref, y_ref, *,
                         BT, C, Cmid, NP, KC, L, NOUT_PAD,
                         TAP_OFFS, OFF_W1, OFF_W2):
    """Fused ClassesHead forward for BT images.

    x_ref:  (BT, C, NE)        channels-first, zero-halo-padded, flattened
                               tokens with a +/- (W+3) margin so every conv tap
                               is a static lane slice.
    p_ref:  (PR, PC)           packed params:
                                 rows [0:Cmid],   cols [0:KC]   : conv taps + bias col
                                 row  Cmid,       cols [0:NP]   : pool mask (1/(H*W) at interior)
                                 row  Cmid+1,     cols [0:L]    : linear1 bias
                                 row  Cmid+2,     cols [0:128]  : linear2 bias (zero padded)
                                 rows [OFF_W1:+Cmid], cols [0:L]  : linear1 weight^T
                                 rows [OFF_W2:+L], cols [0:128]   : linear2 weight^T (zero padded)
    o_ref:  (BT, 1, NOUT_PAD)  padded logits (cols >= 5 are exactly zero)
    y_ref:  (BT, Cmid, NP)     VMEM scratch: conv(+bias) output on the padded grid
    """
    # conv taps + folded conv/BN bias column, stacked on the contraction axis
    w_all = p_ref[0:Cmid, 0:KC]                              # (Cmid, 9*C+1)
    ones_row = jnp.ones((1, NP), jnp.float32)                # hoisted (bias row)

    # --- 3x3 conv (padding=1) : one fused K = 9*C+1 MXU dot per image -------
    for b in range(BT):                                      # static unroll, BT small
        slabs = [x_ref[b, :, o:o + NP] for o in TAP_OFFS]    # 9 x (C, NP) static slices
        xstack = jnp.concatenate(slabs + [ones_row], axis=0)  # (KC, NP)
        y_ref[b] = jnp.dot(w_all, xstack,
                           preferred_element_type=jnp.float32)  # (Cmid, NP)

    # --- SELU + masked global average pool (interior positions only) --------
    y = _selu(y_ref[...])                                    # (BT, Cmid, NP)
    pool_w = p_ref[Cmid:Cmid + 1, 0:NP].reshape(1, 1, NP)    # 1/(H*W) at interior
    feat = jnp.sum(y * pool_w, axis=-1)                      # (BT, Cmid)

    # --- MLP head: linear1 -> SELU -> linear2 --------------------------------
    z1 = jnp.dot(feat, p_ref[OFF_W1:OFF_W1 + Cmid, 0:L],
                 preferred_element_type=jnp.float32)
    z1 = _selu(z1 + p_ref[Cmid + 1:Cmid + 2, 0:L])           # (BT, L)

    z2 = jnp.dot(z1, p_ref[OFF_W2:OFF_W2 + L, 0:NOUT_PAD],
                 preferred_element_type=jnp.float32)
    z2 = z2 + p_ref[Cmid + 2:Cmid + 3, 0:NOUT_PAD]           # (BT, 128), cols>=5 == 0

    o_ref[:, 0, :] = z2.astype(o_ref.dtype)


# ------------------------------ JAX wrapper ----------------------------------
def classes_head_forward(x, params, config, *, batch_tile=None):
    """x: (B, target_h*target_w, channels) -> (B, 5)."""
    C = config['channels']
    Cmid = C // 2
    H, W = config['target_h'], config['target_w']
    L = config['linear_size']
    NOUT = 5
    eps = 1e-5

    B = x.shape[0]
    HW = H * W
    assert x.shape == (B, HW, C)

    HP, WP = H + 2, W + 2
    NP = HP * WP                       # padded flat token count
    MARGIN = WP + 1                    # max |tap offset|
    NE = _round_up(NP + 2 * MARGIN, 128)
    KC = 9 * C + 1                     # contraction: 9 taps * C channels + bias row
    NOUT_PAD = 128                     # lane-dense output width
    OFF_W1 = max(8, _round8(Cmid + 3))
    OFF_W2 = OFF_W1 + _round8(Cmid)
    PR = OFF_W2 + _round8(L)
    PC = _round_up(max(NP, KC, L, NOUT_PAD), 128)

    # Per-step batch tile: amortize grid-step overhead while keeping >= 2 grid
    # steps (v7x has 2 TensorCores sharding the "parallel" axis).
    if batch_tile is None:
        batch_tile = max(1, min(8, -(-B // 2)))
    BT = int(batch_tile)
    Bp = _round_up(B, BT)

    # ---- fold eval-mode BatchNorm into the conv weights / bias (exact) -----
    s = params['bn_w'] / jnp.sqrt(params['bn_var'] + eps)               # (Cmid,)
    w_fold = (params['conv_w'] * s[:, None, None, None]).astype(jnp.float32)
    b_fold = ((params['conv_b'] - params['bn_mean']) * s
              + params['bn_b']).astype(jnp.float32)

    # conv taps: (Cmid, C, 3, 3) -> (Cmid, kh, kw, C) -> (Cmid, 9*C); append bias col
    w_taps = jnp.transpose(w_fold, (0, 2, 3, 1)).reshape(Cmid, 9 * C)
    w_all = jnp.concatenate([w_taps, b_fold[:, None]], axis=1)          # (Cmid, KC)

    # pool mask row over the padded flat grid: 1/(H*W) at interior, 0 at halo
    rr = jnp.arange(NP) // WP
    cc = jnp.arange(NP) % WP
    interior = (rr >= 1) & (rr <= H) & (cc >= 1) & (cc <= W)
    pool_row = jnp.where(interior, 1.0 / HW, 0.0).astype(jnp.float32)

    # ---- pack all small parameters into one constant-index block -----------
    P = jnp.zeros((PR, PC), jnp.float32)
    P = P.at[0:Cmid, 0:KC].set(w_all)
    P = P.at[Cmid, 0:NP].set(pool_row)
    P = P.at[Cmid + 1, 0:L].set(params['lin1_b'].astype(jnp.float32))
    P = P.at[Cmid + 2, 0:NOUT].set(params['lin2_b'].astype(jnp.float32))
    P = P.at[OFF_W1:OFF_W1 + Cmid, 0:L].set(params['lin1_w'].T.astype(jnp.float32))
    P = P.at[OFF_W2:OFF_W2 + L, 0:NOUT].set(params['lin2_w'].T.astype(jnp.float32))

    # ---- layout plumbing (wrapper side): channels-first, zero halo, margin --
    x_img = jnp.transpose(x.reshape(B, H, W, C), (0, 3, 1, 2)).astype(jnp.float32)
    x_pad = jnp.pad(x_img, ((0, 0), (0, 0), (1, 1), (1, 1)))            # (B, C, HP, WP)
    x_ext = jnp.pad(x_pad.reshape(B, C, NP),
                    ((0, Bp - B), (0, 0), (MARGIN, NE - NP - MARGIN)))  # (Bp, C, NE)

    # static lane offsets of the 9 taps inside the extended flat token axis
    tap_offs = tuple(MARGIN + (t // 3 - 1) * WP + (t % 3 - 1) for t in range(9))

    kernel = functools.partial(
        _classes_head_kernel, BT=BT, C=C, Cmid=Cmid, NP=NP, KC=KC, L=L,
        NOUT_PAD=NOUT_PAD, TAP_OFFS=tap_offs, OFF_W1=OFF_W1, OFF_W2=OFF_W2)

    flops = int(Bp * (2 * NP * KC * Cmid + 2 * Cmid * L + 2 * L * NOUT_PAD))
    transcendentals = int(Bp * (NP * Cmid + L))
    bytes_accessed = int((x_ext.size + P.size + Bp * NOUT_PAD) * 4)

    out = pl.pallas_call(
        kernel,
        out_shape=jax.ShapeDtypeStruct((Bp, 1, NOUT_PAD), x.dtype),
        grid_spec=pltpu.PrefetchScalarGridSpec(
            num_scalar_prefetch=0,
            grid=(Bp // BT,),
            in_specs=[
                pl.BlockSpec((BT, C, NE), lambda i: (i, 0, 0)),   # BT halo-padded images
                pl.BlockSpec((PR, PC), lambda i: (0, 0)),         # packed params
            ],
            out_specs=pl.BlockSpec((BT, 1, NOUT_PAD), lambda i: (i, 0, 0)),
            scratch_shapes=[pltpu.VMEM((BT, Cmid, NP), jnp.float32)],
        ),
        compiler_params=pltpu.CompilerParams(
            dimension_semantics=("parallel",)),
        cost_estimate=pl.CostEstimate(
            flops=flops, transcendentals=transcendentals,
            bytes_accessed=bytes_accessed),
    )(x_ext, P)

    return out.reshape(Bp, NOUT_PAD)[:B, :NOUT]


# ------------------------- reference (pure JAX) -------------------------------
def _reference_forward(x, params, config):
    C = config['channels']
    Cmid = C // 2
    H, W = config['target_h'], config['target_w']
    B = x.shape[0]

    img = jnp.transpose(x.reshape(B, H, W, C), (0, 3, 1, 2))          # NCHW
    y = lax.conv_general_dilated(
        img, params['conv_w'], window_strides=(1, 1),
        padding=((1, 1), (1, 1)),
        dimension_numbers=('NCHW', 'OIHW', 'NCHW'))
    y = y + params['conv_b'].reshape(1, Cmid, 1, 1)
    # eval-mode BatchNorm
    s = params['bn_w'] / jnp.sqrt(params['bn_var'] + 1e-5)
    y = ((y - params['bn_mean'].reshape(1, Cmid, 1, 1))
         * s.reshape(1, Cmid, 1, 1)
         + params['bn_b'].reshape(1, Cmid, 1, 1))
    y = _selu(y)
    feat = jnp.mean(y, axis=(2, 3))                                   # (B, Cmid)
    z1 = _selu(feat @ params['lin1_w'].T + params['lin1_b'])
    z2 = z1 @ params['lin2_w'].T + params['lin2_b']
    return z2


# ---------------------------------- main --------------------------------------
if __name__ == "__main__":
    config = dict(channels=4, target_h=16, target_w=16, linear_size=32)
    C = config['channels']
    Cmid = C // 2
    H, W = config['target_h'], config['target_w']
    L = config['linear_size']
    NOUT = 5

    key = jax.random.PRNGKey(0)
    ks = jax.random.split(key, 12)

    params = {
        'conv_w': jax.random.normal(ks[1], (Cmid, C, 3, 3), jnp.float32)
                  / jnp.sqrt(9.0 * C),
        'conv_b': 0.1 * jax.random.normal(ks[2], (Cmid,), jnp.float32),
        'bn_w':   1.0 + 0.1 * jax.random.normal(ks[3], (Cmid,), jnp.float32),
        'bn_b':   0.1 * jax.random.normal(ks[4], (Cmid,), jnp.float32),
        'bn_mean': 0.05 * jax.random.normal(ks[5], (Cmid,), jnp.float32),
        'bn_var': 1.0 + 0.1 * jnp.abs(jax.random.normal(ks[6], (Cmid,), jnp.float32)),
        'lin1_w': jax.random.normal(ks[7], (L, Cmid), jnp.float32) / jnp.sqrt(Cmid),
        'lin1_b': 0.1 * jax.random.normal(ks[8], (L,), jnp.float32),
        'lin2_w': jax.random.normal(ks[9], (NOUT, L), jnp.float32) / jnp.sqrt(L),
        'lin2_b': 0.1 * jax.random.normal(ks[10], (NOUT,), jnp.float32),
    }

    # Small demo shape (B=2 -> one image per step, grid=2).
    B = 2
    x = jax.random.normal(ks[0], (B, H * W, C), jnp.float32)
    out = jax.block_until_ready(classes_head_forward(x, params, config))
    ref = jax.block_until_ready(_reference_forward(x, params, config))
    assert out.shape == (B, NOUT)
    max_err = jnp.max(jnp.abs(out - ref))
    assert jnp.allclose(out, ref, atol=1e-4, rtol=1e-4), (
        f"mismatch vs reference (B=2), max abs err = {max_err}")

    # Exercise the multi-image-per-step path (BT=4, grid=2) as well.
    B2 = 8
    x2 = jax.random.normal(ks[11], (B2, H * W, C), jnp.float32)
    out2 = jax.block_until_ready(classes_head_forward(x2, params, config))
    ref2 = jax.block_until_ready(_reference_forward(x2, params, config))
    max_err2 = jnp.max(jnp.abs(out2 - ref2))
    assert jnp.allclose(out2, ref2, atol=1e-4, rtol=1e-4), (
        f"mismatch vs reference (B=8), max abs err = {max_err2}")

    print("KERNEL_OK")
</pallas_src>

<mosaic_0001>
module attributes {stable_mosaic.version = 11 : i64} {
  func.func @_classes_head_kernel(%arg0: i32, %arg1: memref<1x4x384xf32, #tpu.memory_space<vmem>>, %arg2: memref<48x384xf32, #tpu.memory_space<vmem>>, %arg3: memref<1x1x128xf32, #tpu.memory_space<vmem>>, %arg4: memref<1x2x324xf32, #tpu.memory_space<vmem>>) attributes {dimension_semantics = [#tpu.dimension_semantics<parallel>], iteration_bounds = array<i64: 2>, scalar_prefetch = 0 : i64, scratch_operands = 1 : i64, tpu.core_type = #tpu.core_type<tc>, window_params = [{transform_indices = @transform_0, window_bounds = array<i64: 1, 4, 384>}, {pipeline_mode = #tpu.pipeline_mode<synchronous>, transform_indices = @transform_1, window_bounds = array<i64: 48, 384>}, {transform_indices = @transform_2, window_bounds = array<i64: 1, 1, 128>}]} {
    %c0 = arith.constant 0 : index
    %c0_0 = arith.constant 0 : index
    %0 = vector.load %arg2[%c0, %c0_0] : memref<48x384xf32, #tpu.memory_space<vmem>>, vector<2x37xf32>
    %cst = arith.constant 1.000000e+00 : f32
    %1 = vector.broadcast %cst : f32 to vector<1x324xf32>
    %c0_1 = arith.constant 0 : index
    %c0_2 = arith.constant 0 : index
    %c0_3 = arith.constant 0 : index
    %2 = vector.load %arg1[%c0_1, %c0_2, %c0_3] : memref<1x4x384xf32, #tpu.memory_space<vmem>>, vector<1x4x324xf32>
    %3 = vector.shape_cast %2 : vector<1x4x324xf32> to vector<4x324xf32>
    %c0_4 = arith.constant 0 : index
    %c0_5 = arith.constant 0 : index
    %c1 = arith.constant 1 : index
    %4 = vector.load %arg1[%c0_4, %c0_5, %c1] : memref<1x4x384xf32, #tpu.memory_space<vmem>>, vector<1x4x324xf32>
    %5 = vector.shape_cast %4 : vector<1x4x324xf32> to vector<4x324xf32>
    %c0_6 = arith.constant 0 : index
    %c0_7 = arith.constant 0 : index
    %c2 = arith.constant 2 : index
    %6 = vector.load %arg1[%c0_6, %c0_7, %c2] : memref<1x4x384xf32, #tpu.memory_space<vmem>>, vector<1x4x324xf32>
    %7 = vector.shape_cast %6 : vector<1x4x324xf32> to vector<4x324xf32>
    %c0_8 = arith.constant 0 : index
    %c0_9 = arith.constant 0 : index
    %c18 = arith.constant 18 : index
    %8 = vector.load %arg1[%c0_8, %c0_9, %c18] : memref<1x4x384xf32, #tpu.memory_space<vmem>>, vector<1x4x324xf32>
    %9 = vector.shape_cast %8 : vector<1x4x324xf32> to vector<4x324xf32>
    %c0_10 = arith.constant 0 : index
    %c0_11 = arith.constant 0 : index
    %c19 = arith.constant 19 : index
    %10 = vector.load %arg1[%c0_10, %c0_11, %c19] : memref<1x4x384xf32, #tpu.memory_space<vmem>>, vector<1x4x324xf32>
    %11 = vector.shape_cast %10 : vector<1x4x324xf32> to vector<4x324xf32>
    %c0_12 = arith.constant 0 : index
    %c0_13 = arith.constant 0 : index
    %c20 = arith.constant 20 : index
    %12 = vector.load %arg1[%c0_12, %c0_13, %c20] : memref<1x4x384xf32, #tpu.memory_space<vmem>>, vector<1x4x324xf32>
    %13 = vector.shape_cast %12 : vector<1x4x324xf32> to vector<4x324xf32>
    %c0_14 = arith.constant 0 : index
    %c0_15 = arith.constant 0 : index
    %c36 = arith.constant 36 : index
    %14 = vector.load %arg1[%c0_14, %c0_15, %c36] : memref<1x4x384xf32, #tpu.memory_space<vmem>>, vector<1x4x324xf32>
    %15 = vector.shape_cast %14 : vector<1x4x324xf32> to vector<4x324xf32>
    %c0_16 = arith.constant 0 : index
    %c0_17 = arith.constant 0 : index
    %c37 = arith.constant 37 : index
    %16 = vector.load %arg1[%c0_16, %c0_17, %c37] : memref<1x4x384xf32, #tpu.memory_space<vmem>>, vector<1x4x324xf32>
    %17 = vector.shape_cast %16 : vector<1x4x324xf32> to vector<4x324xf32>
    %c0_18 = arith.constant 0 : index
    %c0_19 = arith.constant 0 : index
    %c38 = arith.constant 38 : index
    %18 = vector.load %arg1[%c0_18, %c0_19, %c38] : memref<1x4x384xf32, #tpu.memory_space<vmem>>, vector<1x4x324xf32>
    %19 = vector.shape_cast %18 : vector<1x4x324xf32> to vector<4x324xf32>
    %20 = tpu.concatenate %3, %5, %7, %9, %11, %13, %15, %17, %19, %1 in 0 : vector<4x324xf32>, vector<4x324xf32>, vector<4x324xf32>, vector<4x324xf32>, vector<4x324xf32>, vector<4x324xf32>, vector<4x324xf32>, vector<4x324xf32>, vector<4x324xf32>, vector<1x324xf32> -> vector<37x324xf32>
    %cst_20 = arith.constant dense<0.000000e+00> : vector<2x324xf32>
    %21 = tpu.matmul %0, %20, %cst_20 {dimension_numbers = #tpu.dot_dimension_numbers<[1], [0], [0], [1], [0, 0, 1, 1], [], []>} : vector<2x37xf32>, vector<37x324xf32>, vector<2x324xf32> -> vector<2x324xf32>
    %c0_21 = arith.constant 0 : index
    %c0_22 = arith.constant 0 : index
    %c0_23 = arith.constant 0 : index
    %22 = vector.load %arg4[%c0_21, %c0_22, %c0_23] : memref<1x2x324xf32, #tpu.memory_space<vmem>>, vector<1x2x324xf32>
    %23 = vector.shape_cast %22 : vector<1x2x324xf32> to vector<2x324xf32>
    %24 = vector.shape_cast %21 : vector<2x324xf32> to vector<1x2x324xf32>
    tpu.vector_store %arg4[%c0_21, %c0_22, %c0_23], %24 {strides = array<i32>} : memref<1x2x324xf32, #tpu.memory_space<vmem>>, vector<1x2x324xf32>,
    %c0_24 = arith.constant 0 : index
    %c0_25 = arith.constant 0 : index
    %c0_26 = arith.constant 0 : index
    %25 = vector.load %arg4[%c0_24, %c0_25, %c0_26] : memref<1x2x324xf32, #tpu.memory_space<vmem>>, vector<1x2x324xf32>
    %cst_27 = arith.constant 0.000000e+00 : f32
    %26 = vector.broadcast %cst_27 : f32 to vector<1x2x324xf32>
    %27 = arith.cmpf ogt, %25, %26 : vector<1x2x324xf32>
    %cst_28 = arith.constant 0.000000e+00 : f32
    %28 = vector.broadcast %cst_28 : f32 to vector<1x2x324xf32>
    %29 = arith.minimumf %25, %28 : vector<1x2x324xf32>
    %30 = math.exp %29 : vector<1x2x324xf32>
    %cst_29 = arith.constant 1.000000e+00 : f32
    %31 = vector.broadcast %cst_29 : f32 to vector<1x2x324xf32>
    %32 = arith.subf %30, %31 : vector<1x2x324xf32>
    %cst_30 = arith.constant 1.67326319 : f32
    %33 = vector.broadcast %cst_30 : f32 to vector<1x2x324xf32>
    %34 = arith.mulf %33, %32 : vector<1x2x324xf32>
    %35 = arith.select %27, %25, %34 : vector<1x2x324xi1>, vector<1x2x324xf32>
    %cst_31 = arith.constant 1.05070102 : f32
    %36 = vector.broadcast %cst_31 : f32 to vector<1x2x324xf32>
    %37 = arith.mulf %36, %35 : vector<1x2x324xf32>
    %c2_32 = arith.constant 2 : index
    %c0_33 = arith.constant 0 : index
    %38 = vector.load %arg2[%c2_32, %c0_33] : memref<48x384xf32, #tpu.memory_space<vmem>>, vector<1x324xf32>
    %39 = vector.shape_cast %38 : vector<1x324xf32> to vector<1x1x324xf32>
    %40 = vector.broadcast %39 : vector<1x1x324xf32> to vector<1x2x324xf32>
    %41 = arith.mulf %37, %40 : vector<1x2x324xf32>
    %cst_34 = arith.constant dense<0.000000e+00> : vector<1x2xf32>
    %42 = vector.multi_reduction <add>, %41, %cst_34 [2] : vector<1x2x324xf32> to vector<1x2xf32>
    %c8 = arith.constant 8 : index
    %c0_35 = arith.constant 0 : index
    %43 = vector.load %arg2[%c8, %c0_35] : memref<48x384xf32, #tpu.memory_space<vmem>>, vector<2x32xf32>
    %cst_36 = arith.constant dense<0.000000e+00> : vector<1x32xf32>
    %44 = tpu.matmul %42, %43, %cst_36 {dimension_numbers = #tpu.dot_dimension_numbers<[1], [0], [0], [1], [0, 0, 1, 1], [], []>} : vector<1x2xf32>, vector<2x32xf32>, vector<1x32xf32> -> vector<1x32xf32>
    %c3 = arith.constant 3 : index
    %c0_37 = arith.constant 0 : index
    %45 = vector.load %arg2[%c3, %c0_37] : memref<48x384xf32, #tpu.memory_space<vmem>>, vector<1x32xf32>
    %46 = arith.addf %44, %45 : vector<1x32xf32>
    %cst_38 = arith.constant 0.000000e+00 : f32
    %47 = vector.broadcast %cst_38 : f32 to vector<1x32xf32>
    %48 = arith.cmpf ogt, %46, %47 : vector<1x32xf32>
    %cst_39 = arith.constant 0.000000e+00 : f32
    %49 = vector.broadcast %cst_39 : f32 to vector<1x32xf32>
    %50 = arith.minimumf %46, %49 : vector<1x32xf32>
    %51 = math.exp %50 : vector<1x32xf32>
    %cst_40 = arith.constant 1.000000e+00 : f32
    %52 = vector.broadcast %cst_40 : f32 to vector<1x32xf32>
    %53 = arith.subf %51, %52 : vector<1x32xf32>
    %cst_41 = arith.constant 1.67326319 : f32
    %54 = vector.broadcast %cst_41 : f32 to vector<1x32xf32>
    %55 = arith.mulf %54, %53 : vector<1x32xf32>
    %56 = arith.select %48, %46, %55 : vector<1x32xi1>, vector<1x32xf32>
    %cst_42 = arith.constant 1.05070102 : f32
    %57 = vector.broadcast %cst_42 : f32 to vector<1x32xf32>
    %58 = arith.mulf %57, %56 : vector<1x32xf32>
    %c16 = arith.constant 16 : index
    %c0_43 = arith.constant 0 : index
    %59 = vector.load %arg2[%c16, %c0_43] : memref<48x384xf32, #tpu.memory_space<vmem>>, vector<32x128xf32>
    %cst_44 = arith.constant dense<0.000000e+00> : vector<1x128xf32>
    %60 = tpu.matmul %58, %59, %cst_44 {dimension_numbers = #tpu.dot_dimension_numbers<[1], [0], [0], [1], [0, 0, 1, 1], [], []>} : vector<1x32xf32>, vector<32x128xf32>, vector<1x128xf32> -> vector<1x128xf32>
    %c4 = arith.constant 4 : index
    %c0_45 = arith.constant 0 : index
    %61 = vector.load %arg2[%c4, %c0_45] : memref<48x384xf32, #tpu.memory_space<vmem>>, vector<1x128xf32>
    %62 = arith.addf %60, %61 : vector<1x128xf32>
    %c0_46 = arith.constant 0 : index
    %c0_47 = arith.constant 0 : index
    %c0_48 = arith.constant 0 : index
    %63 = vector.load %arg3[%c0_46, %c0_47, %c0_48] : memref<1x1x128xf32, #tpu.memory_space<vmem>>, vector<1x1x128xf32>
    %64 = vector.shape_cast %63 : vector<1x1x128xf32> to vector<1x128xf32>
    %65 = vector.shape_cast %62 : vector<1x128xf32> to vector<1x1x128xf32>
    tpu.vector_store %arg3[%c0_46, %c0_47, %c0_48], %65 {strides = array<i32>} : memref<1x1x128xf32, #tpu.memory_space<vmem>>, vector<1x1x128xf32>,
    return
  }
  func.func @transform_0(%arg0: i32) -> (i32, i32, i32) {
    %c0_i32 = arith.constant 0 : i32
    %c0_i32_0 = arith.constant 0 : i32
    %c0_i32_1 = arith.constant 0 : i32
    return %arg0, %c0_i32, %c0_i32_0 : i32, i32, i32
  }
  func.func @transform_1(%arg0: i32) -> (i32, i32) {
    %c0_i32 = arith.constant 0 : i32
    %c0_i32_0 = arith.constant 0 : i32
    %c0_i32_1 = arith.constant 0 : i32
    return %c0_i32, %c0_i32_0 : i32, i32
  }
  func.func @transform_2(%arg0: i32) -> (i32, i32, i32) {
    %c0_i32 = arith.constant 0 : i32
    %c0_i32_0 = arith.constant 0 : i32
    %c0_i32_1 = arith.constant 0 : i32
    return %arg0, %c0_i32, %c0_i32_0 : i32, i32, i32
  }
}

</mosaic_0001>

<llo_original>
// kernel: tpu_custom_call.1
$region0: #{tpu_custom_call.1}
  #allocation0 [shape = 'u32[]', space=smem, size = 0x4, offset = 0x4, fixed_abs, tag = 'smem constant byte address 0x4 - core index']
  #allocation1 [shape = 'u32[144,128]{1,0:T(1,128)}', space=vmem, size = 0x12000, scoped, tag = 'internal scratch']
  #allocation2 [shape = 'f32[1,2,324]{2,1,0:T(2,128)}', space=vmem, size = 0xc00, scoped, tag = 'scratch operand']
  %s0 = inlined_call_operand.hbm [shape: f32[2,4,384], index: 0, kind: input, shape index: {}]
  %s1 = inlined_call_operand.hbm [shape: f32[48,384], index: 1, kind: input, shape index: {}]
  %s2 = inlined_call_operand.hbm [shape: f32[2,1,128], index: 2, kind: output, shape index: {}]
  %s3 = sld [smem:[#allocation0]]
  $region49: #{tpu_custom_call.1} parent=0
    _
  %s5 = ssub.s32 1, %s3
  %s6 = scalar_select 0, %s5, %s3
  $region1: #{tpu_custom_call.1} parent=0
    #allocation3 [shape = 'u8[12288]{0}', space=vmem, size = 0x3000, scoped, tag = 'input window, operand 0']
    #allocation4 [shape = 's32[2]{0}', space=sflag, size = 0x8, scoped, tag = 'scoped memory for tpu_custom_call.1']
    #allocation5 [shape = 's32[2]{0}', space=sflag, size = 0x8, scoped, tag = 'scoped memory for tpu_custom_call.1']
    #allocation6 [shape = 'u8[73728]{0}', space=vmem, size = 0x12000, scoped, tag = 'input window, operand 1, single buffered']
    #allocation7 [shape = 's32[1]{0}', space=sflag, size = 0x4, scoped, tag = 'scoped memory for tpu_custom_call.1']
    #allocation8 [shape = 'u8[1024]{0}', space=vmem, size = 0x400, scoped, tag = 'output window, operand 0']
    %7 = vsyncpa [#allocation4], 0
    %s8 = scalar_lea.sflag [#allocation4], 1
    %9 = vsyncpa %s8, 0
    %10 = vsyncpa [#allocation7], 0
    %11 = vsyncpa [#allocation5], 0
    %s12 = scalar_lea.sflag [#allocation5], 1
    %13 = vsyncpa %s12, 0
    loop: start=0, step=1, limit=4
    $region2: #{tpu_custom_call.1} parent=1 // loop_pre_header
      _
    $region3: #{tpu_custom_call.1} parent=1 // loop_header
      %s15 = sphi 0, %s19
      %p16 = scmp.ge.s32.totalorder %s15, 4
      %s25 = sphi 0, %s27
      %s28 = sphi 0, %s25
      %s29 = sphi 0, %s28
      %s45 = sphi 0, %s29
      %s49 = sphi 0, %s49
      %s51 = sphi 0, %s49
      %s52 = sphi 0, %s51
      %s66 = sphi 0, %s52
      %s72 = sphi 0, %s74
      %s75 = sphi 0, %s72
      %s76 = sphi 0, %s75
      %s92 = sphi 0, %s76
    $region4: #{tpu_custom_call.1} parent=1 // loop_header_branch
      %18 = sbr.rel (%p16) target = $region8
    $region5: #{tpu_custom_call.1} parent=1 // loop_body
      %s20 = ssub.s32 %s15, 1
      %s21 = ssub.s32 %s15, 2
      %s22 = sadd.s32 %s15, 1
      %s23 = ssub.s32 %s15, %s22
      %p24 = scmp.eq.s32.totalorder %s23, 0
      %s26 = sadd.s32 %s25, 1
      %s27 = scalar_select %p24, %s25, %s26
      %p30 = pneg %p24
      %p31 = scmp.eq.s32.totalorder %s15, 1
      %p32 = por %p30, %p31
      %p33 = scmp.ne.s32.totalorder %s25, %s28
      %p34 = scmp.eq.s32.totalorder %s15, 0
      %p35 = por %p33, %p34
      %p36 = scmp.ne.s32.totalorder %s25, %s28
      %p37 = scmp.eq.s32.totalorder %s20, 1
      %p38 = por %p36, %p37
      %p39 = scmp.ne.s32.totalorder %s28, %s29
      %p40 = scmp.eq.s32.totalorder %s20, 0
      %p41 = por %p39, %p40
      %p42 = scmp.ne.s32.totalorder %s28, %s29
      %p43 = scmp.eq.s32.totalorder %s21, 1
      %p44 = por %p42, %p43
      %p46 = scmp.ne.s32.totalorder %s29, %s45
      %p47 = scmp.eq.s32.totalorder %s21, 0
      %p48 = por %p46, %p47
      %s50 = sadd.s32 %s49, 1
      %p53 = scmp.eq.s32.totalorder %s15, 1
      %p54 = scmp.ne.s32.totalorder %s49, %s51
      %p55 = scmp.eq.s32.totalorder %s15, 0
      %p56 = por %p54, %p55
      %p57 = scmp.ne.s32.totalorder %s49, %s51
      %p58 = scmp.eq.s32.totalorder %s20, 1
      %p59 = por %p57, %p58
      %p60 = scmp.ne.s32.totalorder %s51, %s52
      %p61 = scmp.eq.s32.totalorder %s20, 0
      %p62 = por %p60, %p61
      %p63 = scmp.ne.s32.totalorder %s51, %s52
      %p64 = scmp.eq.s32.totalorder %s21, 1
      %p65 = por %p63, %p64
      %p67 = scmp.ne.s32.totalorder %s52, %s66
      %p68 = scmp.eq.s32.totalorder %s21, 0
      %p69 = por %p67, %p68
      %s70 = ssub.s32 %s15, %s22
      %p71 = scmp.eq.s32.totalorder %s70, 0
      %s73 = sadd.s32 %s72, 1
      %s74 = scalar_select %p71, %s72, %s73
      %p77 = pneg %p71
      %p78 = scmp.eq.s32.totalorder %s15, 1
      %p79 = por %p77, %p78
      %p80 = scmp.ne.s32.totalorder %s72, %s75
      %p81 = scmp.eq.s32.totalorder %s15, 0
      %p82 = por %p80, %p81
      %p83 = scmp.ne.s32.totalorder %s72, %s75
      %p84 = scmp.eq.s32.totalorder %s20, 1
      %p85 = por %p83, %p84
      %p86 = scmp.ne.s32.totalorder %s75, %s76
      %p87 = scmp.eq.s32.totalorder %s20, 0
      %p88 = por %p86, %p87
      %p89 = scmp.ne.s32.totalorder %s75, %s76
      %p90 = scmp.eq.s32.totalorder %s21, 1
      %p91 = por %p89, %p90
      %p93 = scmp.ne.s32.totalorder %s76, %s92
      %p94 = scmp.eq.s32.totalorder %s21, 0
      %p95 = por %p93, %p94
      %p96 = scmp.le.s32.totalorder 1, %s15
      %p97 = scmp.lt.s32.totalorder %s15, 3
      %p98 = pnand %p96, %p97
      %p99 = pneg %p98
      // Predicated region
      $region9: #{tpu_custom_call.1} parent=5 // pred_check
        _
      $region10: #{tpu_custom_call.1} parent=5 // pred_check_branch
        %101 = sbr.rel (%p98) target = $region12
      $region11: #{tpu_custom_call.1} parent=5 // pred_region
        %s102 = ssub.s32 %s15, 1
        // Predicated region
        $region13: #{tpu_custom_call.1} parent=11 // pred_check
          %p103 = pneg %p62
        $region14: #{tpu_custom_call.1} parent=11 // pred_check_branch
          %105 = sbr.rel (%p103) target = $region16
        $region15: #{tpu_custom_call.1} parent=11 // pred_region
          %s107 = ssub.s32 2304, 2304
          %108 = vsyncadd [#allocation7], %s107
          %s109 = sshll.u32 [#allocation6], 4
          %s110 = int_to_ptr.vmem [resolvable:$true] %s109
          %115 = dma.hbm_to_vmem [thread:$0]  %s1, 2304, %s110, [#allocation7], 384, 384, 24
        $region16: #{tpu_custom_call.1} parent=11 // pred_fallthru
          _
      $region12: #{tpu_custom_call.1} parent=5 // pred_fallthru
        _
      %p116 = scmp.lt.s32.totalorder %s15, 2
      // Predicated region
      $region17: #{tpu_custom_call.1} parent=5 // pred_check
        %p117 = pneg %p116
      $region18: #{tpu_custom_call.1} parent=5 // pred_check_branch
        %119 = sbr.rel (%p117) target = $region20
      $region19: #{tpu_custom_call.1} parent=5 // pred_region
        // Predicated region
        $region21: #{tpu_custom_call.1} parent=19 // pred_check
          %p120 = pneg %p35
        $region22: #{tpu_custom_call.1} parent=19 // pred_check_branch
          %122 = sbr.rel (%p120) target = $region24
        $region23: #{tpu_custom_call.1} parent=19 // pred_region
          %s123 = sand.u32 %s25, 1
          %s124 = scalar_lea.sflag [#allocation4], %s123
          %s125 = sand.u32 %s25, 1
          %s126 = smul.addr %s125, 12
          %s127 = scalar_lea.vmem [#allocation3], %s126
          %s129 = ssub.s32 192, 192
          %130 = vsyncadd %s124, %s129
          %s131 = smul.addr %s15, 3
          %s132 = smul.addr %s131, 64
          %s133 = scalar_lea.hbm %s0, %s132
          %s135 = sshll.u32 %s127, 4
          %s136 = int_to_ptr.vmem [resolvable:$true] %s135
          %138 = dma.hbm_to_vmem [thread:$0]  %s133, 192, %s136, %s124
        $region24: #{tpu_custom_call.1} parent=19 // pred_fallthru
          _
      $region20: #{tpu_custom_call.1} parent=5 // pred_fallthru
        _
      %p139 = scmp.le.s32.totalorder 1, %s15
      %p140 = scmp.lt.s32.totalorder %s15, 3
      %p141 = pnand %p139, %p140
      %p142 = pneg %p141
      // Predicated region
      $region25: #{tpu_custom_call.1} parent=5 // pred_check
        _
      $region26: #{tpu_custom_call.1} parent=5 // pred_check_branch
        %144 = sbr.rel (%p141) target = $region28
      $region27: #{tpu_custom_call.1} parent=5 // pred_region
        %s145 = ssub.s32 %s15, 1
        %s146 = sand.u32 %s28, 1
        %s147 = scalar_lea.sflag [#allocation4], %s146
        %s148 = sand.u32 %s28, 1
        %s149 = smul.addr %s148, 12
        %s150 = scalar_lea.vmem [#allocation3], %s149
        // Predicated region
        $region29: #{tpu_custom_call.1} parent=27 // pred_check
          %p151 = pneg %p41
        $region30: #{tpu_custom_call.1} parent=27 // pred_check_branch
          %153 = sbr.rel (%p151) target = $region32
        $region31: #{tpu_custom_call.1} parent=27 // pred_region
          %154 = dma.done %s147, 192
        $region32: #{tpu_custom_call.1} parent=27 // pred_fallthru
          _
        // Predicated region
        $region33: #{tpu_custom_call.1} parent=27 // pred_check
          %p155 = pneg %p62
        $region34: #{tpu_custom_call.1} parent=27 // pred_check_branch
          %157 = sbr.rel (%p155) target = $region36
        $region35: #{tpu_custom_call.1} parent=27 // pred_region
          %158 = dma.done [#allocation7], 2304
        $region36: #{tpu_custom_call.1} parent=27 // pred_fallthru
          _
        %s159 = sand.u32 %s28, 1
        %s160 = scalar_lea.sflag [#allocation4], %s159
        %s161 = sand.u32 %s28, 1
        %s162 = smul.addr %s161, 12
        %s163 = scalar_lea.vmem [#allocation3], %s162
        %p164 = pneg %p41
        %p165 = pneg %p38
        %p166 = pneg %p62
        %p167 = pneg %p59
        %p168 = pneg %p88
        %p169 = pneg %p85
        %s170 = sand.u32 %s75, 1
        %s171 = scalar_lea.sflag [#allocation5], %s170
        %s172 = sand.u32 %s75, 1
        %s173 = scalar_lea.vmem [#allocation8], %s172
        %v174 = vld [vmem:[#allocation6] sm:$0x3]
        %v175 = vld [vmem:[%s150] sm:$0xff]
        %v176 = vld [vmem:[%s150 + $0x8] sm:$0xf]
        %v179 = vcombine.high %v175, %v175
        %v181 = vcombine.low %v175, %v175
        %v182 = vcombine.low %v176, %v176
        %183 = vrot.lane.b32.xlu0 %v181, 127
        %v184 = vpop.permute.xlu0 %183
        %185 = vrot.lane.b32.xlu0 %v175, 127
        %v186 = vpop.permute.xlu0 %185
        %187 = vrot.lane.b32.xlu0 %v182, 127
        %v188 = vpop.permute.xlu0 %187
        %vm189 = vcmask 1039360
        %v190 = vsel %vm189, %v184, %v186
        %v191 = vsel %vm189, %v186, %v188
        %195 = vrot.lane.b32.xlu0 %v175, 126
        %v196 = vpop.permute.xlu0 %195
        %197 = vrot.lane.b32.xlu0 %v179, 126
        %v198 = vpop.permute.xlu0 %197
        %199 = vrot.lane.b32.xlu0 %v176, 126
        %v200 = vpop.permute.xlu0 %199
        %vm201 = vcmask 1031168
        %v202 = vsel %vm201, %v196, %v198
        %v203 = vsel %vm201, %v198, %v200
        %207 = vrot.lane.b32.xlu0 %v181, 110
        %v208 = vpop.permute.xlu0 %207
        %209 = vrot.lane.b32.xlu0 %v175, 110
        %v210 = vpop.permute.xlu0 %209
        %211 = vrot.lane.b32.xlu0 %v182, 110
        %v212 = vpop.permute.xlu0 %211
        %vm213 = vcmask 900096
        %v214 = vsel %vm213, %v208, %v210
        %v215 = vsel %vm213, %v210, %v212
        %219 = vrot.lane.b32.xlu0 %v175, 109
        %v220 = vpop.permute.xlu0 %219
        %221 = vrot.lane.b32.xlu0 %v179, 109
        %v222 = vpop.permute.xlu0 %221
        %223 = vrot.lane.b32.xlu0 %v176, 109
        %v224 = vpop.permute.xlu0 %223
        %vm225 = vcmask 891904
        %v226 = vsel %vm225, %v220, %v222
        %v227 = vsel %vm225, %v222, %v224
        %231 = vrot.lane.b32.xlu0 %v181, 108
        %v232 = vpop.permute.xlu0 %231
        %233 = vrot.lane.b32.xlu0 %v175, 108
        %v234 = vpop.permute.xlu0 %233
        %235 = vrot.lane.b32.xlu0 %v182, 108
        %v236 = vpop.permute.xlu0 %235
        %vm237 = vcmask 883712
        %v238 = vsel %vm237, %v232, %v234
        %v239 = vsel %vm237, %v234, %v236
        %243 = vrot.lane.b32.xlu0 %v175, 92
        %v244 = vpop.permute.xlu0 %243
        %245 = vrot.lane.b32.xlu0 %v179, 92
        %v246 = vpop.permute.xlu0 %245
        %247 = vrot.lane.b32.xlu0 %v176, 92
        %v248 = vpop.permute.xlu0 %247
        %vm249 = vcmask 752640
        %v250 = vsel %vm249, %v244, %v246
        %v251 = vsel %vm249, %v246, %v248
        %255 = vrot.lane.b32.xlu0 %v181, 91
        %v256 = vpop.permute.xlu0 %255
        %257 = vrot.lane.b32.xlu0 %v175, 91
        %v258 = vpop.permute.xlu0 %257
        %259 = vrot.lane.b32.xlu0 %v182, 91
        %v260 = vpop.permute.xlu0 %259
        %vm261 = vcmask 744448
        %v262 = vsel %vm261, %v256, %v258
        %v263 = vsel %vm261, %v258, %v260
        %267 = vrot.lane.b32.xlu0 %v175, 90
        %v268 = vpop.permute.xlu0 %267
        %269 = vrot.lane.b32.xlu0 %v179, 90
        %v270 = vpop.permute.xlu0 %269
        %271 = vrot.lane.b32.xlu0 %v176, 90
        %v272 = vpop.permute.xlu0 %271
        %vm273 = vcmask 736256
        %v274 = vsel %vm273, %v268, %v270
        %v275 = vsel %vm273, %v270, %v272
        %vm279 = vcmask 1043456
        %v280 = vsel %vm279, %v175, %v190
        %v281 = vsel %vm279, %v179, %v191
        %v282 = vsel %vm279, %v176, %v188
        %v283 = vsel %vm279, %v202, %v214
        %v284 = vsel %vm279, %v203, %v215
        %v285 = vsel %vm279, %v200, %v212
        %v286 = vsel %vm279, %v226, %v238
        %v287 = vsel %vm279, %v227, %v239
        %v288 = vsel %vm279, %v224, %v236
        %v289 = vsel %vm279, %v250, %v262
        %v290 = vsel %vm279, %v251, %v263
        %v291 = vsel %vm279, %v248, %v260
        %v292 = vsel %vm279, %v274, 1.0
        %v293 = vsel %vm279, %v275, 1.0
        %v294 = vsel %vm279, %v272, 1.0
        %vm295 = vcmask 302080
        %v297 = vsel %vm295, %v174, 0
        %vm299 = vcmask 1044480
        %v301 = vsel %vm299, %v292, 0
        %v304 = vsel %vm299, %v293, 0
        %v307 = vsel %vm299, %v294, 0
        %309 = vmatprep.subr.mxu0 %v281
        %310 = vmatpush1.msra.mxu0 %v280
        %311 = vmatprep.subr.mxu0 %v284
        %312 = vmatpush1.msra.mxu0 %v283
        %313 = vmatprep.subr.mxu0 %v287
        %314 = vmatpush1.msra.mxu0 %v286
        %315 = vmatprep.subr.mxu0 %v290
        %316 = vmatpush1.msra.mxu0 %v289
        %317 = vmatprep.subr.mxu0 %v304
        %318 = vmatpush1.msra.mxu0 %v301
        %319 = vmatprep.subr.mxu0 0.0
        %320 = vmatpush1.msra.mxu0 0.0
        %321 = vmatprep.subr.mxu0 0.0
        %322 = vmatpush1.msra.mxu0 0.0
        %323 = vmatprep.subr.mxu0 0.0
        %324 = vmatpush1.msra.mxu0 0.0
        %325 = vmatprep.subr.mxu0 0.0
        %326 = vmatpush1.msra.mxu0 0.0
        %327 = vmatprep.subr.mxu0 0.0
        %328 = vmatpush1.msra.mxu0 0.0
        %329 = vmatprep.subr.mxu0 0.0
        %330 = vmatpush1.msra.mxu0 0.0
        %331 = vmatprep.subr.mxu0 0.0
        %332 = vmatpush1.msra.mxu0 0.0
        %333 = vmatprep.subr.mxu0 0.0
        %334 = vmatpush1.msra.mxu0 0.0
        %335 = vmatprep.subr.mxu0 0.0
        %336 = vmatpush1.msra.mxu0 0.0
        %337 = vmatprep.subr.mxu0 0.0
        %338 = vmatpush1.msra.mxu0 0.0
        %339 = vmatprep.subr.mxu0 0.0
        %340 = vmatpush1.msra.mxu0 0.0
        %341 = vmatprep.subr.mxu0 0.0
        %342 = vmatpush1.msra.mxu0 0.0
        %343 = vmatprep.subr.mxu0 0.0
        %344 = vmatpush1.msra.mxu0 0.0
        %345 = vmatprep.subr.mxu0 0.0
        %346 = vmatpush1.msra.mxu0 0.0
        %347 = vmatprep.subr.mxu0 0.0
        %348 = vmatpush1.msra.mxu0 0.0
        %349 = vmatprep.subr.mxu0 0.0
        %350 = vmatpush1.msra.mxu0 0.0
        %351 = vmatprep.subr.mxu0 0.0
        %352 = vmatpush1.msra.mxu0 0.0
        %353 = vmatprep.subr.mxu0 0.0
        %354 = vmatpush1.msra.mxu0 0.0
        %355 = vmatprep.subr.mxu0 0.0
        %356 = vmatpush1.msra.mxu0 0.0
        %357 = vmatprep.subr.mxu0 0.0
        %358 = vmatpush1.msra.mxu0 0.0
        %359 = vmatprep.subr.mxu0 0.0
        %360 = vmatpush1.msra.mxu0 0.0
        %361 = vmatprep.subr.mxu0 0.0
        %362 = vmatpush1.msra.mxu0 0.0
        %363 = vmatprep.subr.mxu0 0.0
        %364 = vmatpush1.msra.mxu0 0.0
        %365 = vmatprep.subr.mxu0 0.0
        %366 = vmatpush1.msra.mxu0 0.0
        %367 = vmatprep.subr.mxu0 0.0
        %368 = vmatpush1.msra.mxu0 0.0
        %369 = vmatprep.subr.mxu0 0.0
        %370 = vmatpush1.msra.mxu0 0.0
        %371 = vmatprep.subr.mxu0 0.0
        %372 = vmatpush1.msra.mxu0 0.0
        %373 = vmatprep.mubr.f32.mxu0 0.0
        %374 = vmatmul.mubr.f32.gmra.mrb[0].mxu0 %v297
        %v375 = vpop.f32.mrb[0].mxu0
        %v376 = vadd.f32 0.0, %v375
        %v377 = vpop.f32.mrb[0].mxu0
        %v378 = vadd.f32 0.0, %v377
        %379 = vdwg.mxu0
        %380 = vmatprep.subr.mxu0 0.0
        %381 = vmatpush1.msra.mxu0 %v282
        %382 = vmatprep.subr.mxu0 0.0
        %383 = vmatpush1.msra.mxu0 %v285
        %384 = vmatprep.subr.mxu0 0.0
        %385 = vmatpush1.msra.mxu0 %v288
        %386 = vmatprep.subr.mxu0 0.0
        %387 = vmatpush1.msra.mxu0 %v291
        %388 = vmatprep.subr.mxu0 0.0
        %389 = vmatpush1.msra.mxu0 %v307
        %390 = vmatprep.subr.mxu0 0.0
        %391 = vmatpush1.msra.mxu0 0.0
        %392 = vmatprep.subr.mxu0 0.0
        %393 = vmatpush1.msra.mxu0 0.0
        %394 = vmatprep.subr.mxu0 0.0
        %395 = vmatpush1.msra.mxu0 0.0
        %396 = vmatprep.subr.mxu0 0.0
        %397 = vmatpush1.msra.mxu0 0.0
        %398 = vmatprep.subr.mxu0 0.0
        %399 = vmatpush1.msra.mxu0 0.0
        %400 = vmatprep.subr.mxu0 0.0
        %401 = vmatpush1.msra.mxu0 0.0
        %402 = vmatprep.subr.mxu0 0.0
        %403 = vmatpush1.msra.mxu0 0.0
        %404 = vmatprep.subr.mxu0 0.0
        %405 = vmatpush1.msra.mxu0 0.0
        %406 = vmatprep.subr.mxu0 0.0
        %407 = vmatpush1.msra.mxu0 0.0
        %408 = vmatprep.subr.mxu0 0.0
        %409 = vmatpush1.msra.mxu0 0.0
        %410 = vmatprep.subr.mxu0 0.0
        %411 = vmatpush1.msra.mxu0 0.0
        %412 = vmatprep.subr.mxu0 0.0
        %413 = vmatpush1.msra.mxu0 0.0
        %414 = vmatprep.subr.mxu0 0.0
        %415 = vmatpush1.msra.mxu0 0.0
        %416 = vmatprep.subr.mxu0 0.0
        %417 = vmatpush1.msra.mxu0 0.0
        %418 = vmatprep.subr.mxu0 0.0
        %419 = vmatpush1.msra.mxu0 0.0
        %420 = vmatprep.subr.mxu0 0.0
        %421 = vmatpush1.msra.mxu0 0.0
        %422 = vmatprep.subr.mxu0 0.0
        %423 = vmatpush1.msra.mxu0 0.0
        %424 = vmatprep.subr.mxu0 0.0
        %425 = vmatpush1.msra.mxu0 0.0
        %426 = vmatprep.subr.mxu0 0.0
        %427 = vmatpush1.msra.mxu0 0.0
        %428 = vmatprep.subr.mxu0 0.0
        %429 = vmatpush1.msra.mxu0 0.0
        %430 = vmatprep.subr.mxu0 0.0
        %431 = vmatpush1.msra.mxu0 0.0
        %432 = vmatprep.subr.mxu0 0.0
        %433 = vmatpush1.msra.mxu0 0.0
        %434 = vmatprep.subr.mxu0 0.0
        %435 = vmatpush1.msra.mxu0 0.0
        %436 = vmatprep.subr.mxu0 0.0
        %437 = vmatpush1.msra.mxu0 0.0
        %438 = vmatprep.subr.mxu0 0.0
        %439 = vmatpush1.msra.mxu0 0.0
        %440 = vmatprep.subr.mxu0 0.0
        %441 = vmatpush1.msra.mxu0 0.0
        %442 = vmatprep.subr.mxu0 0.0
        %443 = vmatpush1.msra.mxu0 0.0
        %444 = vmatprep.mubr.f32.mxu0 0.0
        %445 = vmatmul.mubr.f32.gmra.mrb[0].mxu0 %v297
        %v446 = vpop.f32.mrb[0].mxu0
        %v447 = vadd.f32 0.0, %v446
        %v448 = vpop.f32.mrb[0].mxu0
        %449 = vdwg.mxu0
        %v453 = vcombine.low %v376, %v378
        %v455 = vunpack.c.l.s4 1983009808
        %v456 = vunpack.c.0.s8 %v455
        %v457 = vlaneseq
        %v458 = vshrl.u32 %v457, 7
        %v459 = vsub.s32 %v456, %v458
        %v460 = vrot.slane %v453, %v459
        %v462 = vunpack.c.l.s4 1983009808
        %v463 = vunpack.c.0.s8 %v462
        %v464 = vlaneseq
        %v465 = vshrl.u32 %v464, 7
        %v466 = vsub.s32 %v463, %v465
        %v467 = vrot.slane %v447, %v466
        %v468 = vcombine.low %v460, %v467
        %vm470 = vcmask 1041408
        %vm471 = vcmask 1043458
        %vm472 = vmor %vm471, %vm470
        %vm473 = vcmask 553988
        %vm474 = vmor %vm473, %vm472
        %475 = vst.msk [vmem:[#allocation2] sm:$0x3f] %vm474, %v468
        %v476 = vld [vmem:[#allocation2] sm:$0x3f]
        %vm477 = vcmp.gt.f32.partialorder %v476, 0.0
        %v478 = vmin.f32 %v476, 0.0
        %v479 = vmul.f32 %v478, 1.442695
        %v480 = vpow.pop %v479
        %v481 = vsub.f32 %v480, 1.0
        %v482 = vmul.f32 %v481, 1.6732632
        %v483 = vsel %vm477, %v476, %v482
        %v484 = vmul.f32 %v483, 1.050701
        %s485 = scalar_lea.vmem [#allocation6], 2
        %v486 = vld [vmem:[%s485] ss:$8 sm:$0x7]
        %v488 = vlaneseq
        %v489 = vshrl.u32 %v488, 7
        %v490 = vsub.s32 0, %v489
        %v491 = vrot.slane %v486, %v490
        %v492 = vlaneseq
        %v493 = vshrl.u32 %v492, 7
        %v494 = vsub.s32 1, %v493
        %v495 = vrot.slane %v486, %v494
        %v496 = vlaneseq
        %v497 = vshrl.u32 %v496, 7
        %v498 = vsub.s32 2, %v497
        %v499 = vrot.slane %v486, %v498
        %v500 = vcombine.low %v491, %v495
        %v502 = vunpack.c.l.s4 1983009808
        %v503 = vunpack.c.0.s8 %v502
        %v504 = vlaneseq
        %v505 = vshrl.u32 %v504, 7
        %v506 = vsub.s32 %v503, %v505
        %v507 = vrot.slane %v500, %v506
        %v509 = vunpack.c.l.s4 1983009808
        %v510 = vunpack.c.0.s8 %v509
        %v511 = vlaneseq
        %v512 = vshrl.u32 %v511, 7
        %v513 = vsub.s32 %v510, %v512
        %v514 = vrot.slane %v499, %v513
        %v515 = vcombine.low %v507, %v514
        %v517 = vmul.f32 %v484, %v515
        %v519 = vcombine.high %v517, %v517
        %v521 = vunpack.c.l.s4 1983009808
        %v522 = vunpack.c.0.s8 %v521
        %v523 = vlaneseq
        %v524 = vshrl.u32 %v523, 7
        %v525 = vsub.s32 %v522, %v524
        %v526 = vrot.slane %v517, %v525
        %v528 = vunpack.c.l.s4 1983009808
        %v529 = vunpack.c.0.s8 %v528
        %v530 = vlaneseq
        %v531 = vshrl.u32 %v530, 7
        %v532 = vsub.s32 %v529, %v531
        %v533 = vrot.slane %v519, %v532
        %v534 = vcombine.high %v526, %v526
        %v538 = vsel %vm470, %v526, 0.0
        %v539 = vsel %vm470, %v534, 0.0
        %v540 = vadd.f32 %v538, %v539
        %vm541 = vcmask 549888
        %v542 = vsel %vm541, %v533, 0.0
        %v543 = vadd.f32 %v540, %v542
        %544 = vadd.xlane.f32.xlu0 %v543
        %v545 = vpop.xlane.xlu0 %544
        %v546 = vld [vmem:[#allocation6 + $0x18] sm:$0x3]
        %v547 = vld [vmem:[#allocation6 + $0x3] ss:$0 sm:$0xff]
        %v549 = vlaneseq
        %v550 = vand.u32 %v549, 127
        %v551 = vlaneseq
        %v552 = vshrl.u32 %v551, 7
        %v553 = vsub.s32 %v550, %v552
        %v554 = vrot.slane %v545, %v553
        %vm555 = vcmask 15360
        %v556 = vsel %vm555, %v554, 0
        %v559 = vsel %vm470, %v546, 0
        %561 = vmatprep.subr.mxu0 0.0
        %562 = vmatpush1.msra.mxu0 %v559
        %563 = vmatprep.subr.mxu0 0.0
        %564 = vmatpush1.msra.mxu0 0.0
        %565 = vmatprep.subr.mxu0 0.0
        %566 = vmatpush1.msra.mxu0 0.0
        %567 = vmatprep.subr.mxu0 0.0
        %568 = vmatpush1.msra.mxu0 0.0
        %569 = vmatprep.subr.mxu0 0.0
        %570 = vmatpush1.msra.mxu0 0.0
        %571 = vmatprep.subr.mxu0 0.0
        %572 = vmatpush1.msra.mxu0 0.0
        %573 = vmatprep.subr.mxu0 0.0
        %574 = vmatpush1.msra.mxu0 0.0
        %575 = vmatprep.subr.mxu0 0.0
        %576 = vmatpush1.msra.mxu0 0.0
        %577 = vmatprep.subr.mxu0 0.0
        %578 = vmatpush1.msra.mxu0 0.0
        %579 = vmatprep.subr.mxu0 0.0
        %580 = vmatpush1.msra.mxu0 0.0
        %581 = vmatprep.subr.mxu0 0.0
        %582 = vmatpush1.msra.mxu0 0.0
        %583 = vmatprep.subr.mxu0 0.0
        %584 = vmatpush1.msra.mxu0 0.0
        %585 = vmatprep.subr.mxu0 0.0
        %586 = vmatpush1.msra.mxu0 0.0
        %587 = vmatprep.subr.mxu0 0.0
        %588 = vmatpush1.msra.mxu0 0.0
        %589 = vmatprep.subr.mxu0 0.0
        %590 = vmatpush1.msra.mxu0 0.0
        %591 = vmatprep.subr.mxu0 0.0
        %592 = vmatpush1.msra.mxu0 0.0
        %593 = vmatprep.subr.mxu0 0.0
        %594 = vmatpush1.msra.mxu0 0.0
        %595 = vmatprep.subr.mxu0 0.0
        %596 = vmatpush1.msra.mxu0 0.0
        %597 = vmatprep.subr.mxu0 0.0
        %598 = vmatpush1.msra.mxu0 0.0
        %599 = vmatprep.subr.mxu0 0.0
        %600 = vmatpush1.msra.mxu0 0.0
        %601 = vmatprep.subr.mxu0 0.0
        %602 = vmatpush1.msra.mxu0 0.0
        %603 = vmatprep.subr.mxu0 0.0
        %604 = vmatpush1.msra.mxu0 0.0
        %605 = vmatprep.subr.mxu0 0.0
        %606 = vmatpush1.msra.mxu0 0.0
        %607 = vmatprep.subr.mxu0 0.0
        %608 = vmatpush1.msra.mxu0 0.0
        %609 = vmatprep.subr.mxu0 0.0
        %610 = vmatpush1.msra.mxu0 0.0
        %611 = vmatprep.subr.mxu0 0.0
        %612 = vmatpush1.msra.mxu0 0.0
        %613 = vmatprep.subr.mxu0 0.0
        %614 = vmatpush1.msra.mxu0 0.0
        %615 = vmatprep.subr.mxu0 0.0
        %616 = vmatpush1.msra.mxu0 0.0
        %617 = vmatprep.subr.mxu0 0.0
        %618 = vmatpush1.msra.mxu0 0.0
        %619 = vmatprep.subr.mxu0 0.0
        %620 = vmatpush1.msra.mxu0 0.0
        %621 = vmatprep.subr.mxu0 0.0
        %622 = vmatpush1.msra.mxu0 0.0
        %623 = vmatprep.subr.mxu0 0.0
        %624 = vmatpush1.msra.mxu0 0.0
        %625 = vmatprep.mubr.f32.mxu0 0.0
        %626 = vmatmul.mubr.f32.gmra.mrb[0].mxu0 %v556
        %v627 = vpop.f32.mrb[0].mxu0
        %v628 = vadd.f32 %v547, %v627
        %v629 = vpop.f32.mrb[0].mxu0
        %630 = vdwg.mxu0
        %vm631 = vcmp.gt.f32.partialorder %v628, 0.0
        %v632 = vmin.f32 %v628, 0.0
        %v633 = vmul.f32 %v632, 1.442695
        %v634 = vpow.pop %v633
        %v635 = vsub.f32 %v634, 1.0
        %v636 = vmul.f32 %v635, 1.6732632
        %v637 = vsel %vm631, %v628, %v636
        %v638 = vmul.f32 %v637, 1.050701
        %v639 = vld [vmem:[#allocation6 + $0x30] sm:$0xff]
        %v640 = vld [vmem:[#allocation6 + $0x48] sm:$0xff]
        %v641 = vld [vmem:[#allocation6 + $0x60] sm:$0xff]
        %v642 = vld [vmem:[#allocation6 + $0x78] sm:$0xff]
        %v643 = vld [vmem:[#allocation6 + $0x4] ss:$0 sm:$0xff]
        %vm644 = vcmask 261120
        %v646 = vsel %vm644, %v638, 0
        %648 = vmatprep.subr.mxu0 0.0
        %649 = vmatpush1.msra.mxu0 %v639
        %650 = vmatprep.subr.mxu0 0.0
        %651 = vmatpush1.msra.mxu0 %v640
        %652 = vmatprep.subr.mxu0 0.0
        %653 = vmatpush1.msra.mxu0 %v641
        %654 = vmatprep.subr.mxu0 0.0
        %655 = vmatpush1.msra.mxu0 %v642
        %656 = vmatprep.subr.mxu0 0.0
        %657 = vmatpush1.msra.mxu0 0.0
        %658 = vmatprep.subr.mxu0 0.0
        %659 = vmatpush1.msra.mxu0 0.0
        %660 = vmatprep.subr.mxu0 0.0
        %661 = vmatpush1.msra.mxu0 0.0
        %662 = vmatprep.subr.mxu0 0.0
        %663 = vmatpush1.msra.mxu0 0.0
        %664 = vmatprep.subr.mxu0 0.0
        %665 = vmatpush1.msra.mxu0 0.0
        %666 = vmatprep.subr.mxu0 0.0
        %667 = vmatpush1.msra.mxu0 0.0
        %668 = vmatprep.subr.mxu0 0.0
        %669 = vmatpush1.msra.mxu0 0.0
        %670 = vmatprep.subr.mxu0 0.0
        %671 = vmatpush1.msra.mxu0 0.0
        %672 = vmatprep.subr.mxu0 0.0
        %673 = vmatpush1.msra.mxu0 0.0
        %674 = vmatprep.subr.mxu0 0.0
        %675 = vmatpush1.msra.mxu0 0.0
        %676 = vmatprep.subr.mxu0 0.0
        %677 = vmatpush1.msra.mxu0 0.0
        %678 = vmatprep.subr.mxu0 0.0
        %679 = vmatpush1.msra.mxu0 0.0
        %680 = vmatprep.subr.mxu0 0.0
        %681 = vmatpush1.msra.mxu0 0.0
        %682 = vmatprep.subr.mxu0 0.0
        %683 = vmatpush1.msra.mxu0 0.0
        %684 = vmatprep.subr.mxu0 0.0
        %685 = vmatpush1.msra.mxu0 0.0
        %686 = vmatprep.subr.mxu0 0.0
        %687 = vmatpush1.msra.mxu0 0.0
        %688 = vmatprep.subr.mxu0 0.0
        %689 = vmatpush1.msra.mxu0 0.0
        %690 = vmatprep.subr.mxu0 0.0
        %691 = vmatpush1.msra.mxu0 0.0
        %692 = vmatprep.subr.mxu0 0.0
        %693 = vmatpush1.msra.mxu0 0.0
        %694 = vmatprep.subr.mxu0 0.0
        %695 = vmatpush1.msra.mxu0 0.0
        %696 = vmatprep.subr.mxu0 0.0
        %697 = vmatpush1.msra.mxu0 0.0
        %698 = vmatprep.subr.mxu0 0.0
        %699 = vmatpush1.msra.mxu0 0.0
        %700 = vmatprep.subr.mxu0 0.0
        %701 = vmatpush1.msra.mxu0 0.0
        %702 = vmatprep.subr.mxu0 0.0
        %703 = vmatpush1.msra.mxu0 0.0
        %704 = vmatprep.subr.mxu0 0.0
        %705 = vmatpush1.msra.mxu0 0.0
        %706 = vmatprep.subr.mxu0 0.0
        %707 = vmatpush1.msra.mxu0 0.0
        %708 = vmatprep.subr.mxu0 0.0
        %709 = vmatpush1.msra.mxu0 0.0
        %710 = vmatprep.subr.mxu0 0.0
        %711 = vmatpush1.msra.mxu0 0.0
        %712 = vmatprep.mubr.f32.mxu0 0.0
        %713 = vmatmul.mubr.f32.gmra.mrb[0].mxu0 %v646
        %v714 = vpop.f32.mrb[0].mxu0
        %v715 = vadd.f32 %v643, %v714
        %v716 = vpop.f32.mrb[0].mxu0
        %717 = vdwg.mxu0
        %718 = vst [vmem:[%s173] sm:$0x1] %v715
        %s719 = sand.u32 %s75, 1
        %s720 = scalar_lea.sflag [#allocation5], %s719
        %s721 = sand.u32 %s75, 1
        %s722 = scalar_lea.vmem [#allocation8], %s721
        // Predicated region
        $region37: #{tpu_custom_call.1} parent=27 // pred_check
          %p723 = pneg %p85
        $region38: #{tpu_custom_call.1} parent=27 // pred_check_branch
          %725 = sbr.rel (%p723) target = $region40
        $region39: #{tpu_custom_call.1} parent=27 // pred_region
          %s727 = ssub.s32 16, 16
          %728 = vsyncadd %s720, %s727
          %s729 = smul.addr %s20, 16
          %s730 = scalar_lea.hbm %s2, %s729
          %s732 = sshll.u32 %s722, 4
          %s733 = int_to_ptr.vmem [resolvable:$true] %s732
          %735 = dma.vmem_to_hbm [thread:$0]  %s733, 16, %s730, %s720
        $region40: #{tpu_custom_call.1} parent=27 // pred_fallthru
          _
      $region28: #{tpu_custom_call.1} parent=5 // pred_fallthru
        _
      %p736 = scmp.le.s32.totalorder 2, %s15
      // Predicated region
      $region41: #{tpu_custom_call.1} parent=5 // pred_check
        %p737 = pneg %p736
      $region42: #{tpu_custom_call.1} parent=5 // pred_check_branch
        %739 = sbr.rel (%p737) target = $region44
      $region43: #{tpu_custom_call.1} parent=5 // pred_region
        %s740 = ssub.s32 %s15, 2
        // Predicated region
        $region45: #{tpu_custom_call.1} parent=43 // pred_check
          %p741 = pneg %p91
        $region46: #{tpu_custom_call.1} parent=43 // pred_check_branch
          %743 = sbr.rel (%p741) target = $region48
        $region47: #{tpu_custom_call.1} parent=43 // pred_region
          %s744 = sand.u32 %s76, 1
          %s745 = scalar_lea.sflag [#allocation5], %s744
          %s746 = sand.u32 %s76, 1
          %s747 = scalar_lea.vmem [#allocation8], %s746
          %748 = dma.done %s745, 16
        $region48: #{tpu_custom_call.1} parent=43 // pred_fallthru
          _
      $region44: #{tpu_custom_call.1} parent=5 // pred_fallthru
        _
    $region6: #{tpu_custom_call.1} parent=1 // loop_footer
      %s19 = sadd.s32 1, %s15
    $region7: #{tpu_custom_call.1} parent=1 // loop_footer_branch
      %14 = sbr.rel target = $region3
    $region8: #{tpu_custom_call.1} parent=1 // loop_exit
      _
    %749 = vsyncpa [#allocation4], 1
    %s750 = scalar_lea.sflag [#allocation4], 1
    %751 = vsyncpa %s750, 1
    %752 = vsyncpa [#allocation7], 1
    %753 = vsyncpa [#allocation5], 1
    %s754 = scalar_lea.sflag [#allocation5], 1
    %755 = vsyncpa %s754, 1

</llo_original>
